<compile_context>
chip_gen: v7x
topology: tpu7x:2x2x1
jax: 0.10.0
libtpu: 0.0.40
codegen_flags: <defaults>
</compile_context>

<pallas_src>
import jax
import jax.numpy as jnp
from jax.experimental import pallas as pl
from jax.experimental.pallas import tpu as pltpu


def _round_up(n, m):
    return ((n + m - 1) // m) * m


def qvaluemap_kernel(x_ref, w1_ref, b1_ref, w2_ref, b2_ref, w3_ref, b3_ref, o_ref):
    # bf16 MXU operands, f32 accumulation; bias-add / ReLU stay f32 (v5e VPU has no bf16).
    x = x_ref[...].astype(jnp.bfloat16)                       # in-kernel cast (VPU, free)
    h = jnp.dot(x, w1_ref[...], preferred_element_type=jnp.float32) + b1_ref[...]
    h = jnp.maximum(h, 0.0)
    h = jnp.dot(h.astype(jnp.bfloat16), w2_ref[...],
                preferred_element_type=jnp.float32) + b2_ref[...]
    h = jnp.maximum(h, 0.0)
    out = jnp.dot(h.astype(jnp.bfloat16), w3_ref[...],
                  preferred_element_type=jnp.float32) + b3_ref[...]
    o_ref[...] = out.astype(o_ref.dtype)


def _choose_batch_tile(B, batch_tile):
    tb = min(batch_tile, B)
    # v7x megacore: once the batch is big enough, cap the tile so the "parallel"
    # grid axis has >=2 steps (one per TensorCore), but keep tiles >=256 rows so the
    # ~0.35us/step grid overhead stays amortized.
    if B >= 512:
        tb = min(tb, max(256, _round_up(pl.cdiv(B, 2), 16)))
    # bf16 activations pack [16,128] vregs -> round tile rows to 16 when possible.
    mult = 16 if B >= 16 else 8
    return _round_up(max(tb, 1), mult)


def _vmem_limit_bytes(tb, input_size, hidden_size, action_nums):
    x_blk = tb * input_size * 4 * 2                       # f32 tile, double-buffered
    out_blk = tb * action_nums * 4 * 2                    # f32 tile, double-buffered
    weights = (input_size * hidden_size + hidden_size * hidden_size
               + hidden_size * action_nums) * 2           # bf16, single-buffered
    biases = (2 * hidden_size + action_nums) * 4          # f32, single-buffered
    interm = tb * hidden_size * (4 * 3 + 2)               # f32 activations + bf16 copies
    est = x_blk + out_blk + weights + biases + interm
    return int(min(64 << 20, max(2 * est, 4 << 20)))      # 2x headroom, safe on v7x/v5e


def prepare_params(params):
    """One-time conversion (hoisted out of the forward path): bf16 weights, f32 biases."""
    return {
        "w1": params["w1"].astype(jnp.bfloat16),
        "w2": params["w2"].astype(jnp.bfloat16),
        "w3": params["w3"].astype(jnp.bfloat16),
        "b1": params["b1"].astype(jnp.float32),
        "b2": params["b2"].astype(jnp.float32),
        "b3": params["b3"].astype(jnp.float32),
    }


def qvalue_map_forward(x, prepared, *, batch_tile=1024):
    """x: [B, inputSize] float32.  prepared: output of prepare_params
    (weights stored [in_features, out_features], i.e. transposed vs. PyTorch)."""
    B, input_size = x.shape
    w1, b1 = prepared["w1"], prepared["b1"]
    w2, b2 = prepared["w2"], prepared["b2"]
    w3, b3 = prepared["w3"], prepared["b3"]
    hidden_size = w1.shape[1]
    action_nums = w3.shape[1]

    tb = _choose_batch_tile(B, batch_tile)
    grid = (pl.cdiv(B, tb),)

    cost = pl.CostEstimate(
        flops=2 * B * (input_size * hidden_size
                       + hidden_size * hidden_size
                       + hidden_size * action_nums),
        transcendentals=0,
        bytes_accessed=(B * input_size * 4 + B * action_nums * 4
                        + (w1.size + w2.size + w3.size) * 2
                        + (b1.size + b2.size + b3.size) * 4),
    )

    def _resident(shape):
        # Constant block (0,0) every step: single-buffer, never re-DMA'd.
        return pl.BlockSpec(shape, lambda i: (0, 0), pipeline_mode=pl.Buffered(1))

    grid_spec = pltpu.PrefetchScalarGridSpec(
        num_scalar_prefetch=0,
        grid=grid,
        in_specs=[
            pl.BlockSpec((tb, input_size), lambda i: (i, 0)),   # x tile (pipelined)
            _resident((input_size, hidden_size)),               # w1
            _resident((1, hidden_size)),                        # b1
            _resident((hidden_size, hidden_size)),              # w2
            _resident((1, hidden_size)),                        # b2
            _resident((hidden_size, action_nums)),              # w3
            _resident((1, action_nums)),                        # b3
        ],
        out_specs=pl.BlockSpec((tb, action_nums), lambda i: (i, 0)),
    )

    out = pl.pallas_call(
        qvaluemap_kernel,
        out_shape=jax.ShapeDtypeStruct((B, action_nums), jnp.float32),
        grid_spec=grid_spec,
        compiler_params=pltpu.CompilerParams(
            dimension_semantics=("parallel",),
            vmem_limit_bytes=_vmem_limit_bytes(tb, input_size, hidden_size, action_nums),
        ),
        cost_estimate=cost,
    )(x.astype(jnp.float32), w1, b1, w2, b2, w3, b3)

    return out


def init_params(key, input_size, hidden_size, action_nums):
    """Deterministic init mirroring nn.Linear's uniform(-1/sqrt(fan_in), 1/sqrt(fan_in)).
    Weights are stored as [in_features, out_features] (transposed vs. PyTorch)."""
    ks = jax.random.split(key, 6)

    def lin(kw, kb, fan_in, fan_out):
        bound = 1.0 / jnp.sqrt(jnp.float32(fan_in))
        w = jax.random.uniform(kw, (fan_in, fan_out), jnp.float32, -bound, bound)
        b = jax.random.uniform(kb, (1, fan_out), jnp.float32, -bound, bound)
        return w, b

    w1, b1 = lin(ks[0], ks[1], input_size, hidden_size)
    w2, b2 = lin(ks[2], ks[3], hidden_size, hidden_size)
    w3, b3 = lin(ks[4], ks[5], hidden_size, action_nums)
    return {"w1": w1, "b1": b1, "w2": w2, "b2": b2, "w3": w3, "b3": b3}


def reference_forward(x, p):
    h = jnp.maximum(x @ p["w1"] + p["b1"], 0.0)
    h = jnp.maximum(h @ p["w2"] + p["b2"], 0.0)
    return h @ p["w3"] + p["b3"]


if __name__ == "__main__":
    input_size = 16
    hidden_size = 32
    action_nums = 4

    key = jax.random.PRNGKey(0)
    kx1, kx2, kp = jax.random.split(key, 3)
    params = init_params(kp, input_size, hidden_size, action_nums)
    prepared = prepare_params(params)   # one-time weight/bias conversion

    # Small single-tile case.
    x1 = jax.random.normal(kx1, (8, input_size), jnp.float32)
    out1 = jax.block_until_ready(qvalue_map_forward(x1, prepared))
    ref1 = reference_forward(x1, params)
    assert out1.shape == (8, action_nums)
    assert jnp.allclose(out1, ref1, atol=5e-2, rtol=5e-2)   # bf16 MXU operands -> relaxed tol

    # Multi-tile, non-divisible batch: exercises pipelined grid + masked partial last block.
    x2 = jax.random.normal(kx2, (200, input_size), jnp.float32)
    out2 = jax.block_until_ready(qvalue_map_forward(x2, prepared, batch_tile=64))
    ref2 = reference_forward(x2, params)
    assert out2.shape == (200, action_nums)
    assert jnp.allclose(out2, ref2, atol=5e-2, rtol=5e-2)

    print("KERNEL_OK")
</pallas_src>

<mosaic_0001>
module attributes {stable_mosaic.version = 11 : i64} {
  func.func @qvaluemap_kernel(%arg0: i32, %arg1: memref<8x16xf32, #tpu.memory_space<vmem>>, %arg2: memref<16x32xbf16, #tpu.memory_space<vmem>>, %arg3: memref<1x32xf32, #tpu.memory_space<vmem>>, %arg4: memref<32x32xbf16, #tpu.memory_space<vmem>>, %arg5: memref<1x32xf32, #tpu.memory_space<vmem>>, %arg6: memref<32x4xbf16, #tpu.memory_space<vmem>>, %arg7: memref<1x4xf32, #tpu.memory_space<vmem>>, %arg8: memref<8x4xf32, #tpu.memory_space<vmem>>) attributes {dimension_semantics = [#tpu.dimension_semantics<parallel>], iteration_bounds = array<i64: 1>, scalar_prefetch = 0 : i64, scratch_operands = 0 : i64, tpu.core_type = #tpu.core_type<tc>, window_params = [{transform_indices = @transform_0, window_bounds = array<i64: 8, 16>}, {pipeline_mode = #tpu.pipeline_mode<synchronous>, transform_indices = @transform_1, window_bounds = array<i64: 16, 32>}, {pipeline_mode = #tpu.pipeline_mode<synchronous>, transform_indices = @transform_2, window_bounds = array<i64: 1, 32>}, {pipeline_mode = #tpu.pipeline_mode<synchronous>, transform_indices = @transform_3, window_bounds = array<i64: 32, 32>}, {pipeline_mode = #tpu.pipeline_mode<synchronous>, transform_indices = @transform_4, window_bounds = array<i64: 1, 32>}, {pipeline_mode = #tpu.pipeline_mode<synchronous>, transform_indices = @transform_5, window_bounds = array<i64: 32, 4>}, {pipeline_mode = #tpu.pipeline_mode<synchronous>, transform_indices = @transform_6, window_bounds = array<i64: 1, 4>}, {transform_indices = @transform_7, window_bounds = array<i64: 8, 4>}]} {
    %c0 = arith.constant 0 : index
    %c0_0 = arith.constant 0 : index
    %0 = vector.load %arg1[%c0, %c0_0] : memref<8x16xf32, #tpu.memory_space<vmem>>, vector<8x16xf32>
    %1 = arith.truncf %0 : vector<8x16xf32> to vector<8x16xbf16>
    %c0_1 = arith.constant 0 : index
    %c0_2 = arith.constant 0 : index
    %2 = vector.load %arg2[%c0_1, %c0_2] : memref<16x32xbf16, #tpu.memory_space<vmem>>, vector<16x32xbf16>
    %cst = arith.constant dense<0.000000e+00> : vector<8x32xf32>
    %3 = tpu.matmul %1, %2, %cst {dimension_numbers = #tpu.dot_dimension_numbers<[1], [0], [0], [1], [0, 0, 1, 1], [], []>} : vector<8x16xbf16>, vector<16x32xbf16>, vector<8x32xf32> -> vector<8x32xf32>
    %c0_3 = arith.constant 0 : index
    %c0_4 = arith.constant 0 : index
    %4 = vector.load %arg3[%c0_3, %c0_4] : memref<1x32xf32, #tpu.memory_space<vmem>>, vector<1x32xf32>
    %5 = vector.broadcast %4 : vector<1x32xf32> to vector<8x32xf32>
    %6 = arith.addf %3, %5 : vector<8x32xf32>
    %cst_5 = arith.constant 0.000000e+00 : f32
    %7 = vector.broadcast %cst_5 : f32 to vector<8x32xf32>
    %8 = arith.maximumf %6, %7 : vector<8x32xf32>
    %9 = arith.truncf %8 : vector<8x32xf32> to vector<8x32xbf16>
    %c0_6 = arith.constant 0 : index
    %c0_7 = arith.constant 0 : index
    %10 = vector.load %arg4[%c0_6, %c0_7] : memref<32x32xbf16, #tpu.memory_space<vmem>>, vector<32x32xbf16>
    %cst_8 = arith.constant dense<0.000000e+00> : vector<8x32xf32>
    %11 = tpu.matmul %9, %10, %cst_8 {dimension_numbers = #tpu.dot_dimension_numbers<[1], [0], [0], [1], [0, 0, 1, 1], [], []>} : vector<8x32xbf16>, vector<32x32xbf16>, vector<8x32xf32> -> vector<8x32xf32>
    %c0_9 = arith.constant 0 : index
    %c0_10 = arith.constant 0 : index
    %12 = vector.load %arg5[%c0_9, %c0_10] : memref<1x32xf32, #tpu.memory_space<vmem>>, vector<1x32xf32>
    %13 = vector.broadcast %12 : vector<1x32xf32> to vector<8x32xf32>
    %14 = arith.addf %11, %13 : vector<8x32xf32>
    %cst_11 = arith.constant 0.000000e+00 : f32
    %15 = vector.broadcast %cst_11 : f32 to vector<8x32xf32>
    %16 = arith.maximumf %14, %15 : vector<8x32xf32>
    %17 = arith.truncf %16 : vector<8x32xf32> to vector<8x32xbf16>
    %c0_12 = arith.constant 0 : index
    %c0_13 = arith.constant 0 : index
    %18 = vector.load %arg6[%c0_12, %c0_13] : memref<32x4xbf16, #tpu.memory_space<vmem>>, vector<32x4xbf16>
    %cst_14 = arith.constant dense<0.000000e+00> : vector<8x4xf32>
    %19 = tpu.matmul %17, %18, %cst_14 {dimension_numbers = #tpu.dot_dimension_numbers<[1], [0], [0], [1], [0, 0, 1, 1], [], []>} : vector<8x32xbf16>, vector<32x4xbf16>, vector<8x4xf32> -> vector<8x4xf32>
    %c0_15 = arith.constant 0 : index
    %c0_16 = arith.constant 0 : index
    %20 = vector.load %arg7[%c0_15, %c0_16] : memref<1x4xf32, #tpu.memory_space<vmem>>, vector<1x4xf32>
    %21 = vector.broadcast %20 : vector<1x4xf32> to vector<8x4xf32>
    %22 = arith.addf %19, %21 : vector<8x4xf32>
    %c0_17 = arith.constant 0 : index
    %c0_18 = arith.constant 0 : index
    %23 = vector.load %arg8[%c0_17, %c0_18] : memref<8x4xf32, #tpu.memory_space<vmem>>, vector<8x4xf32>
    tpu.vector_store %arg8[%c0_17, %c0_18], %22 {strides = array<i32>} : memref<8x4xf32, #tpu.memory_space<vmem>>, vector<8x4xf32>,
    return
  }
  func.func @transform_0(%arg0: i32) -> (i32, i32) {
    %c0_i32 = arith.constant 0 : i32
    %c0_i32_0 = arith.constant 0 : i32
    return %arg0, %c0_i32 : i32, i32
  }
  func.func @transform_1(%arg0: i32) -> (i32, i32) {
    %c0_i32 = arith.constant 0 : i32
    %c0_i32_0 = arith.constant 0 : i32
    %c0_i32_1 = arith.constant 0 : i32
    return %c0_i32, %c0_i32_0 : i32, i32
  }
  func.func @transform_2(%arg0: i32) -> (i32, i32) {
    %c0_i32 = arith.constant 0 : i32
    %c0_i32_0 = arith.constant 0 : i32
    %c0_i32_1 = arith.constant 0 : i32
    return %c0_i32, %c0_i32_0 : i32, i32
  }
  func.func @transform_3(%arg0: i32) -> (i32, i32) {
    %c0_i32 = arith.constant 0 : i32
    %c0_i32_0 = arith.constant 0 : i32
    %c0_i32_1 = arith.constant 0 : i32
    return %c0_i32, %c0_i32_0 : i32, i32
  }
  func.func @transform_4(%arg0: i32) -> (i32, i32) {
    %c0_i32 = arith.constant 0 : i32
    %c0_i32_0 = arith.constant 0 : i32
    %c0_i32_1 = arith.constant 0 : i32
    return %c0_i32, %c0_i32_0 : i32, i32
  }
  func.func @transform_5(%arg0: i32) -> (i32, i32) {
    %c0_i32 = arith.constant 0 : i32
    %c0_i32_0 = arith.constant 0 : i32
    %c0_i32_1 = arith.constant 0 : i32
    return %c0_i32, %c0_i32_0 : i32, i32
  }
  func.func @transform_6(%arg0: i32) -> (i32, i32) {
    %c0_i32 = arith.constant 0 : i32
    %c0_i32_0 = arith.constant 0 : i32
    %c0_i32_1 = arith.constant 0 : i32
    return %c0_i32, %c0_i32_0 : i32, i32
  }
  func.func @transform_7(%arg0: i32) -> (i32, i32) {
    %c0_i32 = arith.constant 0 : i32
    %c0_i32_0 = arith.constant 0 : i32
    return %arg0, %c0_i32 : i32, i32
  }
}

</mosaic_0001>

<llo_original>
// kernel: tpu_custom_call.1
$region0: #{tpu_custom_call.1}
  #allocation0 [shape = 'u32[]', space=smem, size = 0x4, offset = 0x4, fixed_abs, tag = 'smem constant byte address 0x4 - core index']
  #allocation1 [shape = 'u32[144,128]{1,0:T(1,128)}', space=vmem, size = 0x12000, scoped, tag = 'internal scratch']
  %s0 = inlined_call_operand.vmem [shape: f32[8,16], index: 0, kind: input, shape index: {}]
  %s1 = inlined_call_operand.hbm [shape: bf16[16,32], index: 1, kind: input, shape index: {}]
  %s2 = inlined_call_operand.vmem [shape: f32[1,32], index: 2, kind: input, shape index: {}]
  %s3 = inlined_call_operand.vmem [shape: bf16[32,32], index: 3, kind: input, shape index: {}]
  %s4 = inlined_call_operand.vmem [shape: f32[1,32], index: 4, kind: input, shape index: {}]
  %s5 = inlined_call_operand.vmem [shape: bf16[32,4], index: 5, kind: input, shape index: {}]
  %s6 = inlined_call_operand.vmem [shape: f32[1,4], index: 6, kind: input, shape index: {}]
  %s7 = inlined_call_operand.vmem [shape: f32[8,4], index: 7, kind: output, shape index: {}]
  %s8 = sld [smem:[#allocation0]]
  $region42: #{tpu_custom_call.1} parent=0
    _
  %s10 = ssub.s32 1, %s8
  %s11 = scalar_select 0, %s10, %s8
  $region1: #{tpu_custom_call.1} parent=0
    #allocation2 [shape = 'u8[4096]{0}', space=vmem, size = 0x1000, scoped, tag = 'input window, operand 1, single buffered']
    #allocation3 [shape = 's32[1]{0}', space=sflag, size = 0x4, scoped, tag = 'scoped memory for tpu_custom_call.1']
    %12 = vsyncpa [#allocation3], 0
    // Predicated region
    $region2: #{tpu_custom_call.1} parent=1 // pred_check
      _
    $region3: #{tpu_custom_call.1} parent=1 // pred_check_branch
      %14 = sbr.rel (0) target = $region5
    $region4: #{tpu_custom_call.1} parent=1 // pred_region
      _
    $region5: #{tpu_custom_call.1} parent=1 // pred_fallthru
      _
    // Predicated region
    $region6: #{tpu_custom_call.1} parent=1 // pred_check
      _
    $region7: #{tpu_custom_call.1} parent=1 // pred_check_branch
      %16 = sbr.rel (0) target = $region9
    $region8: #{tpu_custom_call.1} parent=1 // pred_region
      %s18 = ssub.s32 128, 128
      %19 = vsyncadd [#allocation3], %s18
      %s20 = sshll.u32 [#allocation2], 4
      %s21 = int_to_ptr.vmem [resolvable:$true] %s20
      %26 = dma.hbm_to_vmem [thread:$0]  %s1, 128, %s21, [#allocation3], 64, 64, 4
    $region9: #{tpu_custom_call.1} parent=1 // pred_fallthru
      _
    // Predicated region
    $region10: #{tpu_custom_call.1} parent=1 // pred_check
      _
    $region11: #{tpu_custom_call.1} parent=1 // pred_check_branch
      %28 = sbr.rel (0) target = $region13
    $region12: #{tpu_custom_call.1} parent=1 // pred_region
      _
    $region13: #{tpu_custom_call.1} parent=1 // pred_fallthru
      _
    // Predicated region
    $region14: #{tpu_custom_call.1} parent=1 // pred_check
      _
    $region15: #{tpu_custom_call.1} parent=1 // pred_check_branch
      %30 = sbr.rel (0) target = $region17
    $region16: #{tpu_custom_call.1} parent=1 // pred_region
      _
    $region17: #{tpu_custom_call.1} parent=1 // pred_fallthru
      _
    // Predicated region
    $region18: #{tpu_custom_call.1} parent=1 // pred_check
      _
    $region19: #{tpu_custom_call.1} parent=1 // pred_check_branch
      %32 = sbr.rel (0) target = $region21
    $region20: #{tpu_custom_call.1} parent=1 // pred_region
      _
    $region21: #{tpu_custom_call.1} parent=1 // pred_fallthru
      _
    // Predicated region
    $region22: #{tpu_custom_call.1} parent=1 // pred_check
      _
    $region23: #{tpu_custom_call.1} parent=1 // pred_check_branch
      %34 = sbr.rel (0) target = $region25
    $region24: #{tpu_custom_call.1} parent=1 // pred_region
      _
    $region25: #{tpu_custom_call.1} parent=1 // pred_fallthru
      _
    // Predicated region
    $region26: #{tpu_custom_call.1} parent=1 // pred_check
      _
    $region27: #{tpu_custom_call.1} parent=1 // pred_check_branch
      %36 = sbr.rel (0) target = $region29
    $region28: #{tpu_custom_call.1} parent=1 // pred_region
      _
    $region29: #{tpu_custom_call.1} parent=1 // pred_fallthru
      _
    // Predicated region
    $region30: #{tpu_custom_call.1} parent=1 // pred_check
      _
    $region31: #{tpu_custom_call.1} parent=1 // pred_check_branch
      %38 = sbr.rel (0) target = $region33
    $region32: #{tpu_custom_call.1} parent=1 // pred_region
      %39 = dma.done [#allocation3], 128
    $region33: #{tpu_custom_call.1} parent=1 // pred_fallthru
      _
    %v41 = vld [vmem:[%s0] sm:$0xff]
    %v42 = vpack.c.bf16 %v41, %v41
    %v43 = vld [vmem:[#allocation2] sm:$0xf]
    %v44 = vld [vmem:[#allocation2 + $0x4] sm:$0xf]
    %v45 = vld [vmem:[%s2] sm:$0x1]
    %v47 = vlaneseq
    %v48 = vshrl.u32 %v47, 7
    %v49 = vsub.s32 0, %v48
    %v50 = vrot.slane %v45, %v49
    %v54 = vunpack.c.l.b16 %v43
    %v55 = vunpack.c.l.b16 %v44
    %v56 = vpack.c.b16 %v55, %v54
    %vm58 = vcmask 130048
    %v60 = vsel %vm58, %v42, 0
    %62 = vmatprep.subr.bf16.mxu0 0
    %63 = vmatpush1.bf16.msra.mxu0 %v56
    %64 = vmatprep.subr.bf16.mxu0 0
    %65 = vmatpush1.bf16.msra.mxu0 0
    %66 = vmatprep.subr.bf16.mxu0 0
    %67 = vmatpush1.bf16.msra.mxu0 0
    %68 = vmatprep.subr.bf16.mxu0 0
    %69 = vmatpush1.bf16.msra.mxu0 0
    %70 = vmatprep.subr.bf16.mxu0 0
    %71 = vmatpush1.bf16.msra.mxu0 0
    %72 = vmatprep.subr.bf16.mxu0 0
    %73 = vmatpush1.bf16.msra.mxu0 0
    %74 = vmatprep.subr.bf16.mxu0 0
    %75 = vmatpush1.bf16.msra.mxu0 0
    %76 = vmatprep.subr.bf16.mxu0 0
    %77 = vmatpush1.bf16.msra.mxu0 0
    %78 = vmatprep.subr.bf16.mxu0 0
    %79 = vmatpush1.bf16.msra.mxu0 0
    %80 = vmatprep.subr.bf16.mxu0 0
    %81 = vmatpush1.bf16.msra.mxu0 0
    %82 = vmatprep.subr.bf16.mxu0 0
    %83 = vmatpush1.bf16.msra.mxu0 0
    %84 = vmatprep.subr.bf16.mxu0 0
    %85 = vmatpush1.bf16.msra.mxu0 0
    %86 = vmatprep.subr.bf16.mxu0 0
    %87 = vmatpush1.bf16.msra.mxu0 0
    %88 = vmatprep.subr.bf16.mxu0 0
    %89 = vmatpush1.bf16.msra.mxu0 0
    %90 = vmatprep.subr.bf16.mxu0 0
    %91 = vmatpush1.bf16.msra.mxu0 0
    %92 = vmatprep.subr.bf16.mxu0 0
    %93 = vmatpush1.bf16.msra.mxu0 0
    %94 = vmatprep.mubr.bf16.mxu0 0
    %95 = vmatmul.mubr.bf16.gmra.mrb[0].mxu0 %v60
    %v96 = vpop.f32.mrb[0].mxu0
    %v97 = vadd.f32 %v50, %v96
    %v98 = vpop.f32.mrb[0].mxu0
    %v99 = vpop.f32.mrb[0].mxu0
    %v100 = vpop.f32.mrb[0].mxu0
    %101 = vdwg.mxu0
    %v102 = vmax.f32 %v97, 0.0
    %v103 = vpack.c.bf16 %v102, %v102
    %v104 = vld [vmem:[%s3] sm:$0xf]
    %v105 = vld [vmem:[%s3 + $0x4] sm:$0xf]
    %v106 = vld [vmem:[%s3 + $0x8] sm:$0xf]
    %v107 = vld [vmem:[%s3 + $0xc] sm:$0xf]
    %v108 = vld [vmem:[%s4] sm:$0x1]
    %v110 = vlaneseq
    %v111 = vshrl.u32 %v110, 7
    %v112 = vsub.s32 0, %v111
    %v113 = vrot.slane %v108, %v112
    %v119 = vunpack.c.l.b16 %v104
    %v120 = vunpack.c.l.b16 %v105
    %v121 = vunpack.c.l.b16 %v106
    %v122 = vunpack.c.l.b16 %v107
    %v123 = vpack.c.b16 %v120, %v119
    %v124 = vpack.c.b16 %v122, %v121
    %vm127 = vcmask 261120
    %v129 = vsel %vm127, %v103, 0
    %131 = vmatprep.subr.bf16.mxu0 0
    %132 = vmatpush1.bf16.msra.mxu0 %v123
    %133 = vmatprep.subr.bf16.mxu0 0
    %134 = vmatpush1.bf16.msra.mxu0 %v124
    %135 = vmatprep.subr.bf16.mxu0 0
    %136 = vmatpush1.bf16.msra.mxu0 0
    %137 = vmatprep.subr.bf16.mxu0 0
    %138 = vmatpush1.bf16.msra.mxu0 0
    %139 = vmatprep.subr.bf16.mxu0 0
    %140 = vmatpush1.bf16.msra.mxu0 0
    %141 = vmatprep.subr.bf16.mxu0 0
    %142 = vmatpush1.bf16.msra.mxu0 0
    %143 = vmatprep.subr.bf16.mxu0 0
    %144 = vmatpush1.bf16.msra.mxu0 0
    %145 = vmatprep.subr.bf16.mxu0 0
    %146 = vmatpush1.bf16.msra.mxu0 0
    %147 = vmatprep.subr.bf16.mxu0 0
    %148 = vmatpush1.bf16.msra.mxu0 0
    %149 = vmatprep.subr.bf16.mxu0 0
    %150 = vmatpush1.bf16.msra.mxu0 0
    %151 = vmatprep.subr.bf16.mxu0 0
    %152 = vmatpush1.bf16.msra.mxu0 0
    %153 = vmatprep.subr.bf16.mxu0 0
    %154 = vmatpush1.bf16.msra.mxu0 0
    %155 = vmatprep.subr.bf16.mxu0 0
    %156 = vmatpush1.bf16.msra.mxu0 0
    %157 = vmatprep.subr.bf16.mxu0 0
    %158 = vmatpush1.bf16.msra.mxu0 0
    %159 = vmatprep.subr.bf16.mxu0 0
    %160 = vmatpush1.bf16.msra.mxu0 0
    %161 = vmatprep.subr.bf16.mxu0 0
    %162 = vmatpush1.bf16.msra.mxu0 0
    %163 = vmatprep.mubr.bf16.mxu0 0
    %164 = vmatmul.mubr.bf16.gmra.mrb[0].mxu0 %v129
    %v165 = vpop.f32.mrb[0].mxu0
    %v166 = vadd.f32 %v113, %v165
    %v167 = vpop.f32.mrb[0].mxu0
    %v168 = vpop.f32.mrb[0].mxu0
    %v169 = vpop.f32.mrb[0].mxu0
    %170 = vdwg.mxu0
    %v171 = vmax.f32 %v166, 0.0
    %v172 = vpack.c.bf16 %v171, %v171
    %v173 = vld [vmem:[%s5] sm:$0xf]
    %v174 = vld [vmem:[%s5 + $0x4] sm:$0xf]
    %v175 = vld [vmem:[%s5 + $0x8] sm:$0xf]
    %v176 = vld [vmem:[%s5 + $0xc] sm:$0xf]
    %v177 = vld [vmem:[%s6] sm:$0x1]
    %v179 = vlaneseq
    %v180 = vshrl.u32 %v179, 7
    %v181 = vsub.s32 0, %v180
    %v182 = vrot.slane %v177, %v181
    %v188 = vunpack.c.l.b16 %v173
    %v189 = vunpack.c.l.b16 %v174
    %v190 = vunpack.c.l.b16 %v175
    %v191 = vunpack.c.l.b16 %v176
    %v192 = vpack.c.b16 %v189, %v188
    %v193 = vpack.c.b16 %v191, %v190
    %v197 = vsel %vm127, %v172, 0
    %199 = vmatprep.subr.bf16.mxu0 0
    %200 = vmatpush1.bf16.msra.mxu0 %v192
    %201 = vmatprep.subr.bf16.mxu0 0
    %202 = vmatpush1.bf16.msra.mxu0 %v193
    %203 = vmatprep.subr.bf16.mxu0 0
    %204 = vmatpush1.bf16.msra.mxu0 0
    %205 = vmatprep.subr.bf16.mxu0 0
    %206 = vmatpush1.bf16.msra.mxu0 0
    %207 = vmatprep.subr.bf16.mxu0 0
    %208 = vmatpush1.bf16.msra.mxu0 0
    %209 = vmatprep.subr.bf16.mxu0 0
    %210 = vmatpush1.bf16.msra.mxu0 0
    %211 = vmatprep.subr.bf16.mxu0 0
    %212 = vmatpush1.bf16.msra.mxu0 0
    %213 = vmatprep.subr.bf16.mxu0 0
    %214 = vmatpush1.bf16.msra.mxu0 0
    %215 = vmatprep.subr.bf16.mxu0 0
    %216 = vmatpush1.bf16.msra.mxu0 0
    %217 = vmatprep.subr.bf16.mxu0 0
    %218 = vmatpush1.bf16.msra.mxu0 0
    %219 = vmatprep.subr.bf16.mxu0 0
    %220 = vmatpush1.bf16.msra.mxu0 0
    %221 = vmatprep.subr.bf16.mxu0 0
    %222 = vmatpush1.bf16.msra.mxu0 0
    %223 = vmatprep.subr.bf16.mxu0 0
    %224 = vmatpush1.bf16.msra.mxu0 0
    %225 = vmatprep.subr.bf16.mxu0 0
    %226 = vmatpush1.bf16.msra.mxu0 0
    %227 = vmatprep.subr.bf16.mxu0 0
    %228 = vmatpush1.bf16.msra.mxu0 0
    %229 = vmatprep.subr.bf16.mxu0 0
    %230 = vmatpush1.bf16.msra.mxu0 0
    %231 = vmatprep.mubr.bf16.mxu0 0
    %232 = vmatmul.mubr.bf16.gmra.mrb[0].mxu0 %v197
    %v233 = vpop.f32.mrb[0].mxu0
    %v234 = vadd.f32 %v182, %v233
    %v235 = vpop.f32.mrb[0].mxu0
    %v236 = vpop.f32.mrb[0].mxu0
    %v237 = vpop.f32.mrb[0].mxu0
    %238 = vdwg.mxu0
    %vm239 = vcmask 31744
    %240 = vst.msk [vmem:[%s7] sm:$0xff] %vm239, %v234
    // Predicated region
    $region34: #{tpu_custom_call.1} parent=1 // pred_check
      _
    $region35: #{tpu_custom_call.1} parent=1 // pred_check_branch
      %242 = sbr.rel (0) target = $region37
    $region36: #{tpu_custom_call.1} parent=1 // pred_region
      _
    $region37: #{tpu_custom_call.1} parent=1 // pred_fallthru
      _
    // Predicated region
    $region38: #{tpu_custom_call.1} parent=1 // pred_check
      _
    $region39: #{tpu_custom_call.1} parent=1 // pred_check_branch
      %244 = sbr.rel (0) target = $region41
    $region40: #{tpu_custom_call.1} parent=1 // pred_region
      _
    $region41: #{tpu_custom_call.1} parent=1 // pred_fallthru
      _
    %245 = vsyncpa [#allocation3], 1

</llo_original>
